<compile_context>
chip_gen: v6e
topology: v6e:2x2x1
jax: 0.10.0
libtpu: 0.0.40
codegen_flags: <defaults>
</compile_context>

<pallas_src>
import jax
import jax.numpy as jnp
from jax.experimental import pallas as pl
from jax.experimental.pallas import tpu as pltpu

LN_EPS = 1e-5          # torch.nn.LayerNorm default
LANE = 128
BF16_SUBLANE = 16      # bf16 packs 16 rows per 32-bit sublane group


def _round_up(n, m):
    return ((n + m - 1) // m) * m


# ----------------------------- kernel -------------------------------------- #

def make_actor_kernel(features):
    """Fused kernel for the whole Actor.

    Kernel args (in order): x_ref, then per hidden block (w_ref, pack_ref)
    where pack rows are [bias, gamma, beta], then the head (w_ref, pack_ref
    with row 0 = bias), then o_ref.
    """
    feats = tuple(int(f) for f in features)

    def kernel(x_ref, *refs):
        o_ref = refs[-1]
        prm = refs[:-1]

        h = x_ref[...]                                   # (TB, Dpad_in) bf16
        idx = 0
        for feat in feats:
            w_ref = prm[idx]
            p_ref = prm[idx + 1]
            idx += 2
            b = p_ref[0:1, :]
            gamma = p_ref[1:2, :]
            beta = p_ref[2:3, :]

            # Linear on the MXU: bf16 x bf16 -> f32 accumulate.
            y = jnp.dot(h, w_ref[...], preferred_element_type=jnp.float32) + b

            # LayerNorm over the REAL feature count.  Padded lanes of `y` are
            # exactly 0 (padded W columns / bias are 0 -> see
            # pack_actor_params), so the full-lane sum equals the real sum.
            dpad = y.shape[-1]
            inv_n = 1.0 / float(feat)
            mean = jnp.sum(y, axis=-1, keepdims=True) * inv_n
            if feat != dpad:
                lane = jax.lax.broadcasted_iota(jnp.int32, (1, dpad), 1)
                d = jnp.where(lane < feat, y - mean, 0.0)
            else:
                d = y - mean
            var = jnp.sum(d * d, axis=-1, keepdims=True) * inv_n
            # Normalize the masked deviation directly: padded lanes of y_hat
            # are exactly 0 regardless of gamma/beta.
            y_hat = d * jax.lax.rsqrt(var + LN_EPS)
            # Carry activations in bf16 (next matmul consumes bf16 anyway).
            h = jnp.maximum(y_hat * gamma + beta, 0.0).astype(jnp.bfloat16)

        wh_ref = prm[idx]
        ph_ref = prm[idx + 1]
        logits = jnp.dot(h, wh_ref[...],
                         preferred_element_type=jnp.float32) + ph_ref[0:1, :]
        o_ref[...] = logits

    return kernel


# ----------------------------- params -------------------------------------- #

def init_actor_params(key, action_dim, features):
    """Unpadded f32 'master' params mirroring the PyTorch module's shapes.

    Linear weights stored transposed vs. PyTorch: (in_features, out_features).
    Layer 0 is Linear(features[0] -> features[0]) like the reference module.
    """
    blocks = []
    in_dim = features[0]
    for feat in features:
        key, kw, kb = jax.random.split(key, 3)
        bound = 1.0 / float(in_dim) ** 0.5
        w = jax.random.uniform(kw, (in_dim, feat), jnp.float32, -bound, bound)
        b = jax.random.uniform(kb, (1, feat), jnp.float32, -bound, bound)
        gamma = jnp.ones((1, feat), jnp.float32)
        beta = jnp.zeros((1, feat), jnp.float32)
        blocks.append((w, b, gamma, beta))
        in_dim = feat
    key, kw, kb = jax.random.split(key, 3)
    bound = 1.0 / float(in_dim) ** 0.5
    wh = jax.random.uniform(kw, (in_dim, action_dim), jnp.float32, -bound, bound)
    bh = jax.random.uniform(kb, (1, action_dim), jnp.float32, -bound, bound)
    return {"features": list(features), "action_dim": int(action_dim),
            "blocks": blocks, "head": (wh, bh)}


def pack_actor_params(master):
    """Lane-pad everything to multiples of 128; weights -> bf16; pack
    bias/gamma/beta into one (8, Dpad) f32 tile per layer.

    INVARIANT (kernel correctness depends on it): every padded row/column of
    W and every padded lane of bias/gamma/beta is exactly 0.  The kernel's
    LayerNorm statistics sum over the full padded lane width with 1/feat.
    """
    blocks = []
    for (w, b, gamma, beta) in master["blocks"]:
        din, dout = w.shape
        dpi, dpo = _round_up(din, LANE), _round_up(dout, LANE)
        w_pad = jnp.zeros((dpi, dpo), jnp.bfloat16)
        w_pad = w_pad.at[:din, :dout].set(w.astype(jnp.bfloat16))
        pack = jnp.zeros((8, dpo), jnp.float32)
        pack = pack.at[0, :dout].set(b[0])
        pack = pack.at[1, :dout].set(gamma[0])
        pack = pack.at[2, :dout].set(beta[0])
        blocks.append((w_pad, pack))
    wh, bh = master["head"]
    din, dout = wh.shape
    dpi, dpo = _round_up(din, LANE), _round_up(dout, LANE)
    wh_pad = jnp.zeros((dpi, dpo), jnp.bfloat16)
    wh_pad = wh_pad.at[:din, :dout].set(wh.astype(jnp.bfloat16))
    packh = jnp.zeros((8, dpo), jnp.float32).at[0, :dout].set(bh[0])
    return {"features": list(master["features"]),
            "action_dim": master["action_dim"],
            "blocks": blocks, "head": (wh_pad, packh)}


# ----------------------------- forward -------------------------------------- #

def _choose_batch_tile(batch, max_batch_tile):
    """tb multiple of 16, <= max_batch_tile, minimal pad waste, and >= 2 grid
    steps when the batch is large enough (so v7x's 2 TCs both get work)."""
    max_tile = max(BF16_SUBLANE, (max_batch_tile // BF16_SUBLANE) * BF16_SUBLANE)
    n_tiles = -(-batch // max_tile)
    if n_tiles == 1 and batch > BF16_SUBLANE:
        n_tiles = 2
    tb = _round_up(-(-batch // n_tiles), BF16_SUBLANE)
    return tb, n_tiles * tb


def actor_forward(packed, x, *, max_batch_tile=512):
    """Single fused pallas_call over a batch-tile grid; weights stay resident
    (single-buffered) in VMEM across grid steps."""
    features = packed["features"]
    action_dim = packed["action_dim"]
    B, din = x.shape
    dpi = packed["blocks"][0][0].shape[0]
    apad = packed["head"][0].shape[1]

    tb, bpad = _choose_batch_tile(B, max_batch_tile)

    # Feed x as bf16 (first matmul consumes bf16 anyway); skip the padded
    # host-side copy entirely when no padding is needed.
    if bpad == B and dpi == din:
        x_in = x.astype(jnp.bfloat16)
    else:
        x_in = jnp.zeros((bpad, dpi), jnp.bfloat16).at[:B, :din].set(
            x.astype(jnp.bfloat16))

    resident = pl.Buffered(1)   # constant index_map -> no double buffering
    inputs = [x_in]
    in_specs = [pl.BlockSpec((tb, dpi), lambda i: (i, 0))]
    for (w, pack) in packed["blocks"]:
        inputs += [w, pack]
        in_specs += [
            pl.BlockSpec(w.shape, lambda i: (0, 0), pipeline_mode=resident),
            pl.BlockSpec(pack.shape, lambda i: (0, 0), pipeline_mode=resident),
        ]
    wh, packh = packed["head"]
    inputs += [wh, packh]
    in_specs += [
        pl.BlockSpec(wh.shape, lambda i: (0, 0), pipeline_mode=resident),
        pl.BlockSpec(packh.shape, lambda i: (0, 0), pipeline_mode=resident),
    ]

    # Explicit VMEM budget: single-buffered weights + double-buffered x/out
    # tiles + activation headroom; clamp to v7x's 64 MiB physical VMEM.
    weight_bytes = sum(int(a.size) * a.dtype.itemsize for a in inputs[1:])
    io_bytes = 2 * (tb * dpi * 2) + 2 * (tb * apad * 4)
    dmax = max([blk[0].shape[1] for blk in packed["blocks"]] + [apad, dpi])
    act_bytes = 4 * tb * dmax * 4
    vmem_limit = int(min(max(1.5 * (weight_bytes + io_bytes + act_bytes)
                             + (4 << 20), 16 << 20), 64 << 20))

    flops = 2 * bpad * sum(int(w.shape[0]) * int(w.shape[1])
                           for (w, _) in packed["blocks"])
    flops += 2 * bpad * int(wh.shape[0]) * int(wh.shape[1])
    cost = pl.CostEstimate(
        flops=int(flops),
        transcendentals=int(bpad * len(features)),       # one rsqrt / row / LN
        bytes_accessed=int(weight_bytes + bpad * dpi * 2 + bpad * apad * 4))

    out = pl.pallas_call(
        make_actor_kernel(features),
        out_shape=jax.ShapeDtypeStruct((bpad, apad), jnp.float32),
        grid=(bpad // tb,),
        in_specs=in_specs,
        out_specs=pl.BlockSpec((tb, apad), lambda i: (i, 0)),
        compiler_params=pltpu.CompilerParams(
            dimension_semantics=("parallel",),
            vmem_limit_bytes=vmem_limit),
        cost_estimate=cost,
    )(*inputs)
    return out[:B, :action_dim]


def actor_forward_ref(master, x):
    """Pure-JAX reference (bf16 weights/activations into the matmuls, f32
    accumulate and LN math — numerically matched to the kernel)."""
    for (w, b, gamma, beta) in master["blocks"]:
        y = jnp.dot(x.astype(jnp.bfloat16), w.astype(jnp.bfloat16),
                    preferred_element_type=jnp.float32) + b
        mean = jnp.mean(y, axis=-1, keepdims=True)
        var = jnp.mean((y - mean) ** 2, axis=-1, keepdims=True)
        y = (y - mean) * jax.lax.rsqrt(var + LN_EPS) * gamma + beta
        x = jnp.maximum(y, 0.0)
    wh, bh = master["head"]
    return jnp.dot(x.astype(jnp.bfloat16), wh.astype(jnp.bfloat16),
                   preferred_element_type=jnp.float32) + bh


# ----------------------------- main ----------------------------------------- #

if __name__ == "__main__":
    key = jax.random.PRNGKey(0)

    # Small shapes consistent with the module: input dim == features[0].
    batch = 8
    features = [32, 64]
    action_dim = 8

    key, kx, kp = jax.random.split(key, 3)
    x = jax.random.normal(kx, (batch, features[0]), jnp.float32)
    master = init_actor_params(kp, action_dim, features)
    packed = pack_actor_params(master)

    logits = jax.block_until_ready(actor_forward(packed, x))
    ref = actor_forward_ref(master, x)
    assert logits.shape == (batch, action_dim)
    assert jnp.allclose(logits, ref, atol=5e-3, rtol=5e-3), "mismatch vs ref"

    # Multi-tile path (grid > 1, batch padding) to exercise the pipeline.
    key, kx2 = jax.random.split(key)
    x2 = jax.random.normal(kx2, (40, features[0]), jnp.float32)
    logits2 = jax.block_until_ready(
        actor_forward(packed, x2, max_batch_tile=16))
    ref2 = actor_forward_ref(master, x2)
    assert logits2.shape == (40, action_dim)
    assert jnp.allclose(logits2, ref2, atol=5e-3, rtol=5e-3), "mismatch vs ref"

    print("KERNEL_OK")
</pallas_src>

<mosaic_0001>
module attributes {stable_mosaic.version = 11 : i64} {
  func.func @kernel(%arg0: i32, %arg1: memref<16x128xbf16, #tpu.memory_space<vmem>>, %arg2: memref<128x128xbf16, #tpu.memory_space<vmem>>, %arg3: memref<8x128xf32, #tpu.memory_space<vmem>>, %arg4: memref<128x128xbf16, #tpu.memory_space<vmem>>, %arg5: memref<8x128xf32, #tpu.memory_space<vmem>>, %arg6: memref<128x128xbf16, #tpu.memory_space<vmem>>, %arg7: memref<8x128xf32, #tpu.memory_space<vmem>>, %arg8: memref<16x128xf32, #tpu.memory_space<vmem>>) attributes {dimension_semantics = [#tpu.dimension_semantics<parallel>], iteration_bounds = array<i64: 1>, scalar_prefetch = 0 : i64, scratch_operands = 0 : i64, tpu.core_type = #tpu.core_type<tc>, window_params = [{transform_indices = @transform_0, window_bounds = array<i64: 16, 128>}, {pipeline_mode = #tpu.pipeline_mode<synchronous>, transform_indices = @transform_1, window_bounds = array<i64: 128, 128>}, {pipeline_mode = #tpu.pipeline_mode<synchronous>, transform_indices = @transform_2, window_bounds = array<i64: 8, 128>}, {pipeline_mode = #tpu.pipeline_mode<synchronous>, transform_indices = @transform_3, window_bounds = array<i64: 128, 128>}, {pipeline_mode = #tpu.pipeline_mode<synchronous>, transform_indices = @transform_4, window_bounds = array<i64: 8, 128>}, {pipeline_mode = #tpu.pipeline_mode<synchronous>, transform_indices = @transform_5, window_bounds = array<i64: 128, 128>}, {pipeline_mode = #tpu.pipeline_mode<synchronous>, transform_indices = @transform_6, window_bounds = array<i64: 8, 128>}, {transform_indices = @transform_7, window_bounds = array<i64: 16, 128>}]} {
    %c0 = arith.constant 0 : index
    %c0_0 = arith.constant 0 : index
    %0 = vector.load %arg1[%c0, %c0_0] : memref<16x128xbf16, #tpu.memory_space<vmem>>, vector<16x128xbf16>
    %c0_1 = arith.constant 0 : index
    %c0_2 = arith.constant 0 : index
    %1 = vector.load %arg3[%c0_1, %c0_2] : memref<8x128xf32, #tpu.memory_space<vmem>>, vector<1x128xf32>
    %c1 = arith.constant 1 : index
    %c0_3 = arith.constant 0 : index
    %2 = vector.load %arg3[%c1, %c0_3] : memref<8x128xf32, #tpu.memory_space<vmem>>, vector<1x128xf32>
    %c2 = arith.constant 2 : index
    %c0_4 = arith.constant 0 : index
    %3 = vector.load %arg3[%c2, %c0_4] : memref<8x128xf32, #tpu.memory_space<vmem>>, vector<1x128xf32>
    %c0_5 = arith.constant 0 : index
    %c0_6 = arith.constant 0 : index
    %4 = vector.load %arg2[%c0_5, %c0_6] : memref<128x128xbf16, #tpu.memory_space<vmem>>, vector<128x128xbf16>
    %cst = arith.constant dense<0.000000e+00> : vector<16x128xf32>
    %5 = tpu.matmul %0, %4, %cst {dimension_numbers = #tpu.dot_dimension_numbers<[1], [0], [0], [1], [0, 0, 1, 1], [], []>} : vector<16x128xbf16>, vector<128x128xbf16>, vector<16x128xf32> -> vector<16x128xf32>
    %6 = vector.broadcast %1 : vector<1x128xf32> to vector<16x128xf32>
    %7 = arith.addf %5, %6 : vector<16x128xf32>
    %cst_7 = arith.constant dense<0.000000e+00> : vector<16xf32>
    %8 = vector.multi_reduction <add>, %7, %cst_7 [1] : vector<16x128xf32> to vector<16xf32>
    %9 = vector.shape_cast %8 : vector<16xf32> to vector<16x1xf32>
    %cst_8 = arith.constant 3.125000e-02 : f32
    %10 = vector.broadcast %cst_8 : f32 to vector<16x1xf32>
    %11 = arith.mulf %9, %10 : vector<16x1xf32>
    %12 = tpu.iota {dimensions = array<i32: 1>} : vector<1x128xi32>
    %c32_i32 = arith.constant 32 : i32
    %13 = vector.broadcast %c32_i32 : i32 to vector<1x128xi32>
    %14 = arith.cmpi slt, %12, %13 : vector<1x128xi32>
    %15 = vector.broadcast %11 : vector<16x1xf32> to vector<16x128xf32>
    %16 = arith.subf %7, %15 : vector<16x128xf32>
    %cst_9 = arith.constant 0.000000e+00 : f32
    %17 = vector.shape_cast %14 : vector<1x128xi1> to vector<1x128xi1>
    %18 = vector.broadcast %17 : vector<1x128xi1> to vector<16x128xi1>
    %19 = vector.broadcast %cst_9 : f32 to vector<16x128xf32>
    %20 = arith.select %18, %16, %19 : vector<16x128xi1>, vector<16x128xf32>
    %21 = arith.mulf %20, %20 : vector<16x128xf32>
    %cst_10 = arith.constant dense<0.000000e+00> : vector<16xf32>
    %22 = vector.multi_reduction <add>, %21, %cst_10 [1] : vector<16x128xf32> to vector<16xf32>
    %23 = vector.shape_cast %22 : vector<16xf32> to vector<16x1xf32>
    %cst_11 = arith.constant 3.125000e-02 : f32
    %24 = vector.broadcast %cst_11 : f32 to vector<16x1xf32>
    %25 = arith.mulf %23, %24 : vector<16x1xf32>
    %cst_12 = arith.constant 9.99999974E-6 : f32
    %26 = vector.broadcast %cst_12 : f32 to vector<16x1xf32>
    %27 = arith.addf %25, %26 : vector<16x1xf32>
    %28 = math.rsqrt %27 : vector<16x1xf32>
    %29 = vector.broadcast %28 : vector<16x1xf32> to vector<16x128xf32>
    %30 = arith.mulf %20, %29 : vector<16x128xf32>
    %31 = vector.broadcast %2 : vector<1x128xf32> to vector<16x128xf32>
    %32 = arith.mulf %30, %31 : vector<16x128xf32>
    %33 = vector.broadcast %3 : vector<1x128xf32> to vector<16x128xf32>
    %34 = arith.addf %32, %33 : vector<16x128xf32>
    %cst_13 = arith.constant 0.000000e+00 : f32
    %35 = vector.broadcast %cst_13 : f32 to vector<16x128xf32>
    %36 = arith.maximumf %34, %35 : vector<16x128xf32>
    %37 = arith.truncf %36 : vector<16x128xf32> to vector<16x128xbf16>
    %c0_14 = arith.constant 0 : index
    %c0_15 = arith.constant 0 : index
    %38 = vector.load %arg5[%c0_14, %c0_15] : memref<8x128xf32, #tpu.memory_space<vmem>>, vector<1x128xf32>
    %c1_16 = arith.constant 1 : index
    %c0_17 = arith.constant 0 : index
    %39 = vector.load %arg5[%c1_16, %c0_17] : memref<8x128xf32, #tpu.memory_space<vmem>>, vector<1x128xf32>
    %c2_18 = arith.constant 2 : index
    %c0_19 = arith.constant 0 : index
    %40 = vector.load %arg5[%c2_18, %c0_19] : memref<8x128xf32, #tpu.memory_space<vmem>>, vector<1x128xf32>
    %c0_20 = arith.constant 0 : index
    %c0_21 = arith.constant 0 : index
    %41 = vector.load %arg4[%c0_20, %c0_21] : memref<128x128xbf16, #tpu.memory_space<vmem>>, vector<128x128xbf16>
    %cst_22 = arith.constant dense<0.000000e+00> : vector<16x128xf32>
    %42 = tpu.matmul %37, %41, %cst_22 {dimension_numbers = #tpu.dot_dimension_numbers<[1], [0], [0], [1], [0, 0, 1, 1], [], []>} : vector<16x128xbf16>, vector<128x128xbf16>, vector<16x128xf32> -> vector<16x128xf32>
    %43 = vector.broadcast %38 : vector<1x128xf32> to vector<16x128xf32>
    %44 = arith.addf %42, %43 : vector<16x128xf32>
    %cst_23 = arith.constant dense<0.000000e+00> : vector<16xf32>
    %45 = vector.multi_reduction <add>, %44, %cst_23 [1] : vector<16x128xf32> to vector<16xf32>
    %46 = vector.shape_cast %45 : vector<16xf32> to vector<16x1xf32>
    %cst_24 = arith.constant 1.562500e-02 : f32
    %47 = vector.broadcast %cst_24 : f32 to vector<16x1xf32>
    %48 = arith.mulf %46, %47 : vector<16x1xf32>
    %49 = tpu.iota {dimensions = array<i32: 1>} : vector<1x128xi32>
    %c64_i32 = arith.constant 64 : i32
    %50 = vector.broadcast %c64_i32 : i32 to vector<1x128xi32>
    %51 = arith.cmpi slt, %49, %50 : vector<1x128xi32>
    %52 = vector.broadcast %48 : vector<16x1xf32> to vector<16x128xf32>
    %53 = arith.subf %44, %52 : vector<16x128xf32>
    %cst_25 = arith.constant 0.000000e+00 : f32
    %54 = vector.shape_cast %51 : vector<1x128xi1> to vector<1x128xi1>
    %55 = vector.broadcast %54 : vector<1x128xi1> to vector<16x128xi1>
    %56 = vector.broadcast %cst_25 : f32 to vector<16x128xf32>
    %57 = arith.select %55, %53, %56 : vector<16x128xi1>, vector<16x128xf32>
    %58 = arith.mulf %57, %57 : vector<16x128xf32>
    %cst_26 = arith.constant dense<0.000000e+00> : vector<16xf32>
    %59 = vector.multi_reduction <add>, %58, %cst_26 [1] : vector<16x128xf32> to vector<16xf32>
    %60 = vector.shape_cast %59 : vector<16xf32> to vector<16x1xf32>
    %cst_27 = arith.constant 1.562500e-02 : f32
    %61 = vector.broadcast %cst_27 : f32 to vector<16x1xf32>
    %62 = arith.mulf %60, %61 : vector<16x1xf32>
    %cst_28 = arith.constant 9.99999974E-6 : f32
    %63 = vector.broadcast %cst_28 : f32 to vector<16x1xf32>
    %64 = arith.addf %62, %63 : vector<16x1xf32>
    %65 = math.rsqrt %64 : vector<16x1xf32>
    %66 = vector.broadcast %65 : vector<16x1xf32> to vector<16x128xf32>
    %67 = arith.mulf %57, %66 : vector<16x128xf32>
    %68 = vector.broadcast %39 : vector<1x128xf32> to vector<16x128xf32>
    %69 = arith.mulf %67, %68 : vector<16x128xf32>
    %70 = vector.broadcast %40 : vector<1x128xf32> to vector<16x128xf32>
    %71 = arith.addf %69, %70 : vector<16x128xf32>
    %cst_29 = arith.constant 0.000000e+00 : f32
    %72 = vector.broadcast %cst_29 : f32 to vector<16x128xf32>
    %73 = arith.maximumf %71, %72 : vector<16x128xf32>
    %74 = arith.truncf %73 : vector<16x128xf32> to vector<16x128xbf16>
    %c0_30 = arith.constant 0 : index
    %c0_31 = arith.constant 0 : index
    %75 = vector.load %arg6[%c0_30, %c0_31] : memref<128x128xbf16, #tpu.memory_space<vmem>>, vector<128x128xbf16>
    %cst_32 = arith.constant dense<0.000000e+00> : vector<16x128xf32>
    %76 = tpu.matmul %74, %75, %cst_32 {dimension_numbers = #tpu.dot_dimension_numbers<[1], [0], [0], [1], [0, 0, 1, 1], [], []>} : vector<16x128xbf16>, vector<128x128xbf16>, vector<16x128xf32> -> vector<16x128xf32>
    %c0_33 = arith.constant 0 : index
    %c0_34 = arith.constant 0 : index
    %77 = vector.load %arg7[%c0_33, %c0_34] : memref<8x128xf32, #tpu.memory_space<vmem>>, vector<1x128xf32>
    %78 = vector.broadcast %77 : vector<1x128xf32> to vector<16x128xf32>
    %79 = arith.addf %76, %78 : vector<16x128xf32>
    %c0_35 = arith.constant 0 : index
    %c0_36 = arith.constant 0 : index
    %80 = vector.load %arg8[%c0_35, %c0_36] : memref<16x128xf32, #tpu.memory_space<vmem>>, vector<16x128xf32>
    tpu.vector_store %arg8[%c0_35, %c0_36], %79 {strides = array<i32>} : memref<16x128xf32, #tpu.memory_space<vmem>>, vector<16x128xf32>,
    return
  }
  func.func @transform_0(%arg0: i32) -> (i32, i32) {
    %c0_i32 = arith.constant 0 : i32
    %c0_i32_0 = arith.constant 0 : i32
    return %arg0, %c0_i32 : i32, i32
  }
  func.func @transform_1(%arg0: i32) -> (i32, i32) {
    %c0_i32 = arith.constant 0 : i32
    %c0_i32_0 = arith.constant 0 : i32
    %c0_i32_1 = arith.constant 0 : i32
    return %c0_i32, %c0_i32_0 : i32, i32
  }
  func.func @transform_2(%arg0: i32) -> (i32, i32) {
    %c0_i32 = arith.constant 0 : i32
    %c0_i32_0 = arith.constant 0 : i32
    %c0_i32_1 = arith.constant 0 : i32
    return %c0_i32, %c0_i32_0 : i32, i32
  }
  func.func @transform_3(%arg0: i32) -> (i32, i32) {
    %c0_i32 = arith.constant 0 : i32
    %c0_i32_0 = arith.constant 0 : i32
    %c0_i32_1 = arith.constant 0 : i32
    return %c0_i32, %c0_i32_0 : i32, i32
  }
  func.func @transform_4(%arg0: i32) -> (i32, i32) {
    %c0_i32 = arith.constant 0 : i32
    %c0_i32_0 = arith.constant 0 : i32
    %c0_i32_1 = arith.constant 0 : i32
    return %c0_i32, %c0_i32_0 : i32, i32
  }
  func.func @transform_5(%arg0: i32) -> (i32, i32) {
    %c0_i32 = arith.constant 0 : i32
    %c0_i32_0 = arith.constant 0 : i32
    %c0_i32_1 = arith.constant 0 : i32
    return %c0_i32, %c0_i32_0 : i32, i32
  }
  func.func @transform_6(%arg0: i32) -> (i32, i32) {
    %c0_i32 = arith.constant 0 : i32
    %c0_i32_0 = arith.constant 0 : i32
    %c0_i32_1 = arith.constant 0 : i32
    return %c0_i32, %c0_i32_0 : i32, i32
  }
  func.func @transform_7(%arg0: i32) -> (i32, i32) {
    %c0_i32 = arith.constant 0 : i32
    %c0_i32_0 = arith.constant 0 : i32
    return %arg0, %c0_i32 : i32, i32
  }
}

</mosaic_0001>

<llo_original>
// kernel: tpu_custom_call.1
$region0: #{tpu_custom_call.1}
  #allocation0 [shape = 'u32[]', space=smem, size = 0x4, offset = 0x4, fixed_abs, tag = 'smem constant byte address 0x4 - core index']
  #allocation1 [shape = 'u32[144,128]{1,0:T(1,128)}', space=vmem, size = 0x12000, scoped, tag = 'internal scratch']
  %s0 = inlined_call_operand.hbm [shape: bf16[16,128], index: 0, kind: input, shape index: {}]
  %s1 = inlined_call_operand.hbm [shape: bf16[128,128], index: 1, kind: input, shape index: {}]
  %s2 = inlined_call_operand.hbm [shape: f32[8,128], index: 2, kind: input, shape index: {}]
  %s3 = inlined_call_operand.hbm [shape: bf16[128,128], index: 3, kind: input, shape index: {}]
  %s4 = inlined_call_operand.hbm [shape: f32[8,128], index: 4, kind: input, shape index: {}]
  %s5 = inlined_call_operand.hbm [shape: bf16[128,128], index: 5, kind: input, shape index: {}]
  %s6 = inlined_call_operand.vmem [shape: f32[8,128], index: 6, kind: input, shape index: {}]
  %s7 = inlined_call_operand.hbm [shape: f32[16,128], index: 7, kind: output, shape index: {}]
  %s8 = sld [smem:[#allocation0]]
  $region62: #{tpu_custom_call.1} parent=0
    _
  %s10 = ssub.s32 1, %s8
  %s11 = scalar_select 0, %s10, %s8
  $region1: #{tpu_custom_call.1} parent=0
    #allocation2 [shape = 'u8[4096]{0}', space=vmem, size = 0x1000, scoped, tag = 'input window, operand 0, single buffered']
    #allocation3 [shape = 's32[1]{0}', space=sflag, size = 0x4, scoped, tag = 'scoped memory for tpu_custom_call.1']
    #allocation4 [shape = 's32[1]{0}', space=sflag, size = 0x4, scoped, tag = 'scoped memory for tpu_custom_call.1']
    #allocation5 [shape = 'u8[32768]{0}', space=vmem, size = 0x8000, scoped, tag = 'input window, operand 1, single buffered']
    #allocation6 [shape = 's32[1]{0}', space=sflag, size = 0x4, scoped, tag = 'scoped memory for tpu_custom_call.1']
    #allocation7 [shape = 'u8[4096]{0}', space=vmem, size = 0x1000, scoped, tag = 'input window, operand 2, single buffered']
    #allocation8 [shape = 'u8[32768]{0}', space=vmem, size = 0x8000, scoped, tag = 'input window, operand 3, single buffered']
    #allocation9 [shape = 's32[1]{0}', space=sflag, size = 0x4, scoped, tag = 'scoped memory for tpu_custom_call.1']
    #allocation10 [shape = 'u8[4096]{0}', space=vmem, size = 0x1000, scoped, tag = 'input window, operand 4, single buffered']
    #allocation11 [shape = 'u8[32768]{0}', space=vmem, size = 0x8000, scoped, tag = 'input window, operand 5, single buffered']
    #allocation12 [shape = 's32[1]{0}', space=sflag, size = 0x4, scoped, tag = 'scoped memory for tpu_custom_call.1']
    #allocation13 [shape = 'u8[8192]{0}', space=vmem, size = 0x2000, scoped, tag = 'output window, operand 0, single buffered']
    %12 = vsyncpa [#allocation3], 0
    %13 = vsyncpa [#allocation6], 0
    %14 = vsyncpa [#allocation9], 0
    %15 = vsyncpa [#allocation12], 0
    %16 = vsyncpa [#allocation4], 0
    // Predicated region
    $region2: #{tpu_custom_call.1} parent=1 // pred_check
      _
    $region3: #{tpu_custom_call.1} parent=1 // pred_check_branch
      %18 = sbr.rel (0) target = $region5
    $region4: #{tpu_custom_call.1} parent=1 // pred_region
      %s20 = ssub.s32 128, 128
      %21 = vsyncadd [#allocation3], %s20
      %s22 = sshll.u32 [#allocation2], 4
      %s23 = int_to_ptr.vmem [resolvable:$true] %s22
      %28 = dma.hbm_to_vmem [thread:$0]  %s0, 128, %s23, [#allocation3], 64, 64, 4
    $region5: #{tpu_custom_call.1} parent=1 // pred_fallthru
      _
    // Predicated region
    $region6: #{tpu_custom_call.1} parent=1 // pred_check
      _
    $region7: #{tpu_custom_call.1} parent=1 // pred_check_branch
      %30 = sbr.rel (0) target = $region9
    $region8: #{tpu_custom_call.1} parent=1 // pred_region
      %s32 = ssub.s32 1024, 1024
      %33 = vsyncadd [#allocation6], %s32
      %s34 = sshll.u32 [#allocation5], 4
      %s35 = int_to_ptr.vmem [resolvable:$true] %s34
      %40 = dma.hbm_to_vmem [thread:$0]  %s1, 1024, %s35, [#allocation6], 64, 64, 4
    $region9: #{tpu_custom_call.1} parent=1 // pred_fallthru
      _
    // Predicated region
    $region10: #{tpu_custom_call.1} parent=1 // pred_check
      _
    $region11: #{tpu_custom_call.1} parent=1 // pred_check_branch
      %42 = sbr.rel (0) target = $region13
    $region12: #{tpu_custom_call.1} parent=1 // pred_region
      %s44 = ssub.s32 128, 128
      %45 = vsyncadd [#allocation6], %s44
      %s47 = sshll.u32 [#allocation7], 4
      %s48 = int_to_ptr.vmem [resolvable:$true] %s47
      %50 = dma.hbm_to_vmem [thread:$0]  %s2, 128, %s48, [#allocation6]
    $region13: #{tpu_custom_call.1} parent=1 // pred_fallthru
      _
    // Predicated region
    $region14: #{tpu_custom_call.1} parent=1 // pred_check
      _
    $region15: #{tpu_custom_call.1} parent=1 // pred_check_branch
      %52 = sbr.rel (0) target = $region17
    $region16: #{tpu_custom_call.1} parent=1 // pred_region
      %s54 = ssub.s32 1024, 1024
      %55 = vsyncadd [#allocation9], %s54
      %s56 = sshll.u32 [#allocation8], 4
      %s57 = int_to_ptr.vmem [resolvable:$true] %s56
      %62 = dma.hbm_to_vmem [thread:$0]  %s3, 1024, %s57, [#allocation9], 64, 64, 4
    $region17: #{tpu_custom_call.1} parent=1 // pred_fallthru
      _
    // Predicated region
    $region18: #{tpu_custom_call.1} parent=1 // pred_check
      _
    $region19: #{tpu_custom_call.1} parent=1 // pred_check_branch
      %64 = sbr.rel (0) target = $region21
    $region20: #{tpu_custom_call.1} parent=1 // pred_region
      %s66 = ssub.s32 128, 128
      %67 = vsyncadd [#allocation9], %s66
      %s69 = sshll.u32 [#allocation10], 4
      %s70 = int_to_ptr.vmem [resolvable:$true] %s69
      %72 = dma.hbm_to_vmem [thread:$0]  %s4, 128, %s70, [#allocation9]
    $region21: #{tpu_custom_call.1} parent=1 // pred_fallthru
      _
    // Predicated region
    $region22: #{tpu_custom_call.1} parent=1 // pred_check
      _
    $region23: #{tpu_custom_call.1} parent=1 // pred_check_branch
      %74 = sbr.rel (0) target = $region25
    $region24: #{tpu_custom_call.1} parent=1 // pred_region
      %s76 = ssub.s32 1024, 1024
      %77 = vsyncadd [#allocation12], %s76
      %s78 = sshll.u32 [#allocation11], 4
      %s79 = int_to_ptr.vmem [resolvable:$true] %s78
      %84 = dma.hbm_to_vmem [thread:$0]  %s5, 1024, %s79, [#allocation12], 64, 64, 4
    $region25: #{tpu_custom_call.1} parent=1 // pred_fallthru
      _
    // Predicated region
    $region26: #{tpu_custom_call.1} parent=1 // pred_check
      _
    $region27: #{tpu_custom_call.1} parent=1 // pred_check_branch
      %86 = sbr.rel (0) target = $region29
    $region28: #{tpu_custom_call.1} parent=1 // pred_region
      _
    $region29: #{tpu_custom_call.1} parent=1 // pred_fallthru
      _
    // Predicated region
    $region30: #{tpu_custom_call.1} parent=1 // pred_check
      _
    $region31: #{tpu_custom_call.1} parent=1 // pred_check_branch
      %88 = sbr.rel (0) target = $region33
    $region32: #{tpu_custom_call.1} parent=1 // pred_region
      %89 = dma.done [#allocation3], 128
    $region33: #{tpu_custom_call.1} parent=1 // pred_fallthru
      _
    // Predicated region
    $region34: #{tpu_custom_call.1} parent=1 // pred_check
      _
    $region35: #{tpu_custom_call.1} parent=1 // pred_check_branch
      %91 = sbr.rel (0) target = $region37
    $region36: #{tpu_custom_call.1} parent=1 // pred_region
      %92 = dma.done [#allocation6], 1024
    $region37: #{tpu_custom_call.1} parent=1 // pred_fallthru
      _
    // Predicated region
    $region38: #{tpu_custom_call.1} parent=1 // pred_check
      _
    $region39: #{tpu_custom_call.1} parent=1 // pred_check_branch
      %94 = sbr.rel (0) target = $region41
    $region40: #{tpu_custom_call.1} parent=1 // pred_region
      %95 = dma.done [#allocation6], 128
    $region41: #{tpu_custom_call.1} parent=1 // pred_fallthru
      _
    // Predicated region
    $region42: #{tpu_custom_call.1} parent=1 // pred_check
      _
    $region43: #{tpu_custom_call.1} parent=1 // pred_check_branch
      %97 = sbr.rel (0) target = $region45
    $region44: #{tpu_custom_call.1} parent=1 // pred_region
      %98 = dma.done [#allocation9], 1024
    $region45: #{tpu_custom_call.1} parent=1 // pred_fallthru
      _
    // Predicated region
    $region46: #{tpu_custom_call.1} parent=1 // pred_check
      _
    $region47: #{tpu_custom_call.1} parent=1 // pred_check_branch
      %100 = sbr.rel (0) target = $region49
    $region48: #{tpu_custom_call.1} parent=1 // pred_region
      %101 = dma.done [#allocation9], 128
    $region49: #{tpu_custom_call.1} parent=1 // pred_fallthru
      _
    // Predicated region
    $region50: #{tpu_custom_call.1} parent=1 // pred_check
      _
    $region51: #{tpu_custom_call.1} parent=1 // pred_check_branch
      %103 = sbr.rel (0) target = $region53
    $region52: #{tpu_custom_call.1} parent=1 // pred_region
      %104 = dma.done [#allocation12], 1024
    $region53: #{tpu_custom_call.1} parent=1 // pred_fallthru
      _
    %v106 = vld [vmem:[#allocation2] sm:$0xf]
    %v107 = vld [vmem:[#allocation2 + $0x4] sm:$0xf]
    %v108 = vld [vmem:[#allocation7] sm:$0x1]
    %v109 = vld [vmem:[#allocation7 + $0x1] sm:$0x1]
    %v110 = vld [vmem:[#allocation7 + $0x2] sm:$0x1]
    %v111 = vld [vmem:[#allocation5] sm:$0xf]
    %v112 = vld [vmem:[#allocation5 + $0x4] sm:$0xf]
    %v113 = vld [vmem:[#allocation5 + $0x8] sm:$0xf]
    %v114 = vld [vmem:[#allocation5 + $0xc] sm:$0xf]
    %v115 = vld [vmem:[#allocation5 + $0x10] sm:$0xf]
    %v116 = vld [vmem:[#allocation5 + $0x14] sm:$0xf]
    %v117 = vld [vmem:[#allocation5 + $0x18] sm:$0xf]
    %v118 = vld [vmem:[#allocation5 + $0x1c] sm:$0xf]
    %v119 = vld [vmem:[#allocation5 + $0x20] sm:$0xf]
    %v120 = vld [vmem:[#allocation5 + $0x24] sm:$0xf]
    %v121 = vld [vmem:[#allocation5 + $0x28] sm:$0xf]
    %v122 = vld [vmem:[#allocation5 + $0x2c] sm:$0xf]
    %v123 = vld [vmem:[#allocation5 + $0x30] sm:$0xf]
    %v124 = vld [vmem:[#allocation5 + $0x34] sm:$0xf]
    %v125 = vld [vmem:[#allocation5 + $0x38] sm:$0xf]
    %v126 = vld [vmem:[#allocation5 + $0x3c] sm:$0xf]
    %v127 = vlaneseq
    %v128 = vshrl.u32 %v127, 7
    %v129 = vsub.s32 0, %v128
    %v130 = vrot.slane %v108, %v129
    %v133 = vunpack.c.l.b16 %v106
    %v134 = vunpack.c.l.b16 %v107
    %v135 = vpack.c.b16 %v134, %v133
    %v153 = vunpack.c.l.b16 %v111
    %v154 = vunpack.c.l.b16 %v112
    %v155 = vunpack.c.l.b16 %v113
    %v156 = vunpack.c.l.b16 %v114
    %v157 = vunpack.c.l.b16 %v115
    %v158 = vunpack.c.l.b16 %v116
    %v159 = vunpack.c.l.b16 %v117
    %v160 = vunpack.c.l.b16 %v118
    %v161 = vunpack.c.l.b16 %v119
    %v162 = vunpack.c.l.b16 %v120
    %v163 = vunpack.c.l.b16 %v121
    %v164 = vunpack.c.l.b16 %v122
    %v165 = vunpack.c.l.b16 %v123
    %v166 = vunpack.c.l.b16 %v124
    %v167 = vunpack.c.l.b16 %v125
    %v168 = vunpack.c.l.b16 %v126
    %v169 = vpack.c.b16 %v154, %v153
    %v170 = vpack.c.b16 %v156, %v155
    %v171 = vpack.c.b16 %v158, %v157
    %v172 = vpack.c.b16 %v160, %v159
    %v173 = vpack.c.b16 %v162, %v161
    %v174 = vpack.c.b16 %v164, %v163
    %v175 = vpack.c.b16 %v166, %v165
    %v176 = vpack.c.b16 %v168, %v167
    %185 = vmatprep.subr.bf16.mxu0 0
    %186 = vmatpush1.bf16.msra.mxu0 %v176
    %187 = vmatprep.subr.bf16.mxu0 0
    %188 = vmatpush1.bf16.msra.mxu0 %v175
    %189 = vmatprep.subr.bf16.mxu0 0
    %190 = vmatpush1.bf16.msra.mxu0 %v174
    %191 = vmatprep.subr.bf16.mxu0 0
    %192 = vmatpush1.bf16.msra.mxu0 %v173
    %193 = vmatprep.subr.bf16.mxu0 0
    %194 = vmatpush1.bf16.msra.mxu0 %v172
    %195 = vmatprep.subr.bf16.mxu0 0
    %196 = vmatpush1.bf16.msra.mxu0 %v171
    %197 = vmatprep.subr.bf16.mxu0 0
    %198 = vmatpush1.bf16.msra.mxu0 %v170
    %199 = vmatprep.subr.bf16.mxu0 0
    %200 = vmatpush1.bf16.msra.mxu0 %v169
    %201 = vmatprep.subr.bf16.mxu0 0
    %202 = vmatpush2.bf16.msra.mxu0 0
    %203 = vmatprep.subr.bf16.mxu0 0
    %204 = vmatpush2.bf16.msra.mxu0 0
    %205 = vmatprep.subr.bf16.mxu0 0
    %206 = vmatpush2.bf16.msra.mxu0 0
    %207 = vmatprep.subr.bf16.mxu0 0
    %208 = vmatpush2.bf16.msra.mxu0 0
    %209 = vmatprep.subr.bf16.mxu0 0
    %210 = vmatpush2.bf16.msra.mxu0 0
    %211 = vmatprep.subr.bf16.mxu0 0
    %212 = vmatpush2.bf16.msra.mxu0 0
    %213 = vmatprep.subr.bf16.mxu0 0
    %214 = vmatpush2.bf16.msra.mxu0 0
    %215 = vmatprep.subr.bf16.mxu0 0
    %216 = vmatpush2.bf16.msra.mxu0 0
    %217 = vmatprep.mubr.bf16.mxu0 0
    %218 = vmatmul.mubr.bf16.gmra.mxu0 %v135
    %v219 = vpop.f32.mrf.mxu0
    %v220 = vadd.f32 %v130, %v219
    %v221 = vpop.f32.mrf.mxu0
    %v222 = vpop.f32.mrf.mxu0
    %v223 = vadd.f32 %v130, %v222
    %v224 = vpop.f32.mrf.mxu0
    %225 = vdwg.mxu0
    %226 = vadd.xlane.f32.xlu0 %v220
    %v227 = vpop.xlane.xlu0 %226
    %228 = vadd.xlane.f32.xlu0 %v223
    %v229 = vpop.xlane.xlu0 %228
    %v230 = vmul.f32 %v227, 0.03125
    %v231 = vmul.f32 %v229, 0.03125
    %v232 = vlaneseq
    %v233 = vand.u32 %v232, 127
    %vm234 = vcmp.lt.s32.totalorder %v233, 32
    %v235 = vsub.f32 %v220, %v230
    %v236 = vsub.f32 %v223, %v231
    %v237 = vsel %vm234, 1, 0
    %vm238 = vcmp.eq.s32.totalorder %v237, 1
    %v239 = vsel %vm238, %v235, 0.0
    %v240 = vsel %vm238, %v236, 0.0
    %v241 = vmul.f32 %v239, %v239
    %v242 = vmul.f32 %v240, %v240
    %243 = vadd.xlane.f32.xlu0 %v241
    %v244 = vpop.xlane.xlu0 %243
    %245 = vadd.xlane.f32.xlu0 %v242
    %v246 = vpop.xlane.xlu0 %245
    %v247 = vmul.f32 %v244, 0.03125
    %v248 = vmul.f32 %v246, 0.03125
    %v249 = vadd.f32 %v247, 1e-05
    %v250 = vadd.f32 %v248, 1e-05
    %v251 = vrsqrt.pop %v249
    %v252 = vrsqrt.pop %v250
    %v253 = vmul.f32 %v239, %v251
    %v254 = vmul.f32 %v240, %v252
    %v255 = vlaneseq
    %v256 = vshrl.u32 %v255, 7
    %v257 = vsub.s32 0, %v256
    %v258 = vrot.slane %v109, %v257
    %v259 = vmul.f32 %v253, %v258
    %v260 = vmul.f32 %v254, %v258
    %v261 = vlaneseq
    %v262 = vshrl.u32 %v261, 7
    %v263 = vsub.s32 0, %v262
    %v264 = vrot.slane %v110, %v263
    %v265 = vadd.f32 %v259, %v264
    %v266 = vadd.f32 %v260, %v264
    %v267 = vmax.f32 %v265, 0.0
    %v268 = vmax.f32 %v266, 0.0
    %v269 = vpack.c.bf16 %v268, %v267
    %v270 = vld [vmem:[#allocation10] sm:$0x1]
    %v271 = vld [vmem:[#allocation10 + $0x1] sm:$0x1]
    %v272 = vld [vmem:[#allocation10 + $0x2] sm:$0x1]
    %v273 = vld [vmem:[#allocation8] sm:$0xf]
    %v274 = vld [vmem:[#allocation8 + $0x4] sm:$0xf]
    %v275 = vld [vmem:[#allocation8 + $0x8] sm:$0xf]
    %v276 = vld [vmem:[#allocation8 + $0xc] sm:$0xf]
    %v277 = vld [vmem:[#allocation8 + $0x10] sm:$0xf]
    %v278 = vld [vmem:[#allocation8 + $0x14] sm:$0xf]
    %v279 = vld [vmem:[#allocation8 + $0x18] sm:$0xf]
    %v280 = vld [vmem:[#allocation8 + $0x1c] sm:$0xf]
    %v281 = vld [vmem:[#allocation8 + $0x20] sm:$0xf]
    %v282 = vld [vmem:[#allocation8 + $0x24] sm:$0xf]
    %v283 = vld [vmem:[#allocation8 + $0x28] sm:$0xf]
    %v284 = vld [vmem:[#allocation8 + $0x2c] sm:$0xf]
    %v285 = vld [vmem:[#allocation8 + $0x30] sm:$0xf]
    %v286 = vld [vmem:[#allocation8 + $0x34] sm:$0xf]
    %v287 = vld [vmem:[#allocation8 + $0x38] sm:$0xf]
    %v288 = vld [vmem:[#allocation8 + $0x3c] sm:$0xf]
    %v289 = vlaneseq
    %v290 = vshrl.u32 %v289, 7
    %v291 = vsub.s32 0, %v290
    %v292 = vrot.slane %v270, %v291
    %v309 = vunpack.c.l.b16 %v273
    %v310 = vunpack.c.l.b16 %v274
    %v311 = vunpack.c.l.b16 %v275
    %v312 = vunpack.c.l.b16 %v276
    %v313 = vunpack.c.l.b16 %v277
    %v314 = vunpack.c.l.b16 %v278
    %v315 = vunpack.c.l.b16 %v279
    %v316 = vunpack.c.l.b16 %v280
    %v317 = vunpack.c.l.b16 %v281
    %v318 = vunpack.c.l.b16 %v282
    %v319 = vunpack.c.l.b16 %v283
    %v320 = vunpack.c.l.b16 %v284
    %v321 = vunpack.c.l.b16 %v285
    %v322 = vunpack.c.l.b16 %v286
    %v323 = vunpack.c.l.b16 %v287
    %v324 = vunpack.c.l.b16 %v288
    %v325 = vpack.c.b16 %v310, %v309
    %v326 = vpack.c.b16 %v312, %v311
    %v327 = vpack.c.b16 %v314, %v313
    %v328 = vpack.c.b16 %v316, %v315
    %v329 = vpack.c.b16 %v318, %v317
    %v330 = vpack.c.b16 %v320, %v319
    %v331 = vpack.c.b16 %v322, %v321
    %v332 = vpack.c.b16 %v324, %v323
    %341 = vmatprep.subr.bf16.mxu0 0
    %342 = vmatpush1.bf16.msra.mxu0 %v332
    %343 = vmatprep.subr.bf16.mxu0 0
    %344 = vmatpush1.bf16.msra.mxu0 %v331
    %345 = vmatprep.subr.bf16.mxu0 0
    %346 = vmatpush1.bf16.msra.mxu0 %v330
    %347 = vmatprep.subr.bf16.mxu0 0
    %348 = vmatpush1.bf16.msra.mxu0 %v329
    %349 = vmatprep.subr.bf16.mxu0 0
    %350 = vmatpush1.bf16.msra.mxu0 %v328
    %351 = vmatprep.subr.bf16.mxu0 0
    %352 = vmatpush1.bf16.msra.mxu0 %v327
    %353 = vmatprep.subr.bf16.mxu0 0
    %354 = vmatpush1.bf16.msra.mxu0 %v326
    %355 = vmatprep.subr.bf16.mxu0 0
    %356 = vmatpush1.bf16.msra.mxu0 %v325
    %357 = vmatprep.subr.bf16.mxu0 0
    %358 = vmatpush2.bf16.msra.mxu0 0
    %359 = vmatprep.subr.bf16.mxu0 0
    %360 = vmatpush2.bf16.msra.mxu0 0
    %361 = vmatprep.subr.bf16.mxu0 0
    %362 = vmatpush2.bf16.msra.mxu0 0
    %363 = vmatprep.subr.bf16.mxu0 0
    %364 = vmatpush2.bf16.msra.mxu0 0
    %365 = vmatprep.subr.bf16.mxu0 0
    %366 = vmatpush2.bf16.msra.mxu0 0
    %367 = vmatprep.subr.bf16.mxu0 0
    %368 = vmatpush2.bf16.msra.mxu0 0
    %369 = vmatprep.subr.bf16.mxu0 0
    %370 = vmatpush2.bf16.msra.mxu0 0
    %371 = vmatprep.subr.bf16.mxu0 0
    %372 = vmatpush2.bf16.msra.mxu0 0
    %373 = vmatprep.mubr.bf16.mxu0 0
    %374 = vmatmul.mubr.bf16.gmra.mxu0 %v269
    %v375 = vpop.f32.mrf.mxu0
    %v376 = vadd.f32 %v292, %v375
    %v377 = vpop.f32.mrf.mxu0
    %v378 = vpop.f32.mrf.mxu0
    %v379 = vadd.f32 %v292, %v378
    %v380 = vpop.f32.mrf.mxu0
    %381 = vdwg.mxu0
    %382 = vadd.xlane.f32.xlu0 %v376
    %v383 = vpop.xlane.xlu0 %382
    %384 = vadd.xlane.f32.xlu0 %v379
    %v385 = vpop.xlane.xlu0 %384
    %v386 = vmul.f32 %v383, 0.015625
    %v387 = vmul.f32 %v385, 0.015625
    %vm388 = vcmp.lt.s32.totalorder %v233, 64
    %v389 = vsub.f32 %v376, %v386
    %v390 = vsub.f32 %v379, %v387
    %v391 = vsel %vm388, 1, 0
    %vm392 = vcmp.eq.s32.totalorder %v391, 1
    %v393 = vsel %vm392, %v389, 0.0
    %v394 = vsel %vm392, %v390, 0.0
    %v395 = vmul.f32 %v393, %v393
    %v396 = vmul.f32 %v394, %v394
    %397 = vadd.xlane.f32.xlu0 %v395
    %v398 = vpop.xlane.xlu0 %397
    %399 = vadd.xlane.f32.xlu0 %v396
    %v400 = vpop.xlane.xlu0 %399
    %v401 = vmul.f32 %v398, 0.015625
    %v402 = vmul.f32 %v400, 0.015625
    %v403 = vadd.f32 %v401, 1e-05
    %v404 = vadd.f32 %v402, 1e-05
    %v405 = vrsqrt.pop %v403
    %v406 = vrsqrt.pop %v404
    %v407 = vmul.f32 %v393, %v405
    %v408 = vmul.f32 %v394, %v406
    %v409 = vlaneseq
    %v410 = vshrl.u32 %v409, 7
    %v411 = vsub.s32 0, %v410
    %v412 = vrot.slane %v271, %v411
    %v413 = vmul.f32 %v407, %v412
    %v414 = vmul.f32 %v408, %v412
    %v415 = vlaneseq
    %v416 = vshrl.u32 %v415, 7
    %v417 = vsub.s32 0, %v416
    %v418 = vrot.slane %v272, %v417
    %v419 = vadd.f32 %v413, %v418
    %v420 = vadd.f32 %v414, %v418
    %v421 = vmax.f32 %v419, 0.0
    %v422 = vmax.f32 %v420, 0.0
    %v423 = vpack.c.bf16 %v422, %v421
    %v424 = vld [vmem:[#allocation11] sm:$0xf]
    %v425 = vld [vmem:[#allocation11 + $0x4] sm:$0xf]
    %v426 = vld [vmem:[#allocation11 + $0x8] sm:$0xf]
    %v427 = vld [vmem:[#allocation11 + $0xc] sm:$0xf]
    %v428 = vld [vmem:[#allocation11 + $0x10] sm:$0xf]
    %v429 = vld [vmem:[#allocation11 + $0x14] sm:$0xf]
    %v430 = vld [vmem:[#allocation11 + $0x18] sm:$0xf]
    %v431 = vld [vmem:[#allocation11 + $0x1c] sm:$0xf]
    %v432 = vld [vmem:[#allocation11 + $0x20] sm:$0xf]
    %v433 = vld [vmem:[#allocation11 + $0x24] sm:$0xf]
    %v434 = vld [vmem:[#allocation11 + $0x28] sm:$0xf]
    %v435 = vld [vmem:[#allocation11 + $0x2c] sm:$0xf]
    %v436 = vld [vmem:[#allocation11 + $0x30] sm:$0xf]
    %v437 = vld [vmem:[#allocation11 + $0x34] sm:$0xf]
    %v438 = vld [vmem:[#allocation11 + $0x38] sm:$0xf]
    %v439 = vld [vmem:[#allocation11 + $0x3c] sm:$0xf]
    %v440 = vld [vmem:[%s6] sm:$0x1]
    %v441 = vlaneseq
    %v442 = vshrl.u32 %v441, 7
    %v443 = vsub.s32 0, %v442
    %v444 = vrot.slane %v440, %v443
    %v461 = vunpack.c.l.b16 %v424
    %v462 = vunpack.c.l.b16 %v425
    %v463 = vunpack.c.l.b16 %v426
    %v464 = vunpack.c.l.b16 %v427
    %v465 = vunpack.c.l.b16 %v428
    %v466 = vunpack.c.l.b16 %v429
    %v467 = vunpack.c.l.b16 %v430
    %v468 = vunpack.c.l.b16 %v431
    %v469 = vunpack.c.l.b16 %v432
    %v470 = vunpack.c.l.b16 %v433
    %v471 = vunpack.c.l.b16 %v434
    %v472 = vunpack.c.l.b16 %v435
    %v473 = vunpack.c.l.b16 %v436
    %v474 = vunpack.c.l.b16 %v437
    %v475 = vunpack.c.l.b16 %v438
    %v476 = vunpack.c.l.b16 %v439
    %v477 = vpack.c.b16 %v462, %v461
    %v478 = vpack.c.b16 %v464, %v463
    %v479 = vpack.c.b16 %v466, %v465
    %v480 = vpack.c.b16 %v468, %v467
    %v481 = vpack.c.b16 %v470, %v469
    %v482 = vpack.c.b16 %v472, %v471
    %v483 = vpack.c.b16 %v474, %v473
    %v484 = vpack.c.b16 %v476, %v475
    %493 = vmatprep.subr.bf16.mxu0 0
    %494 = vmatpush1.bf16.msra.mxu0 %v484
    %495 = vmatprep.subr.bf16.mxu0 0
    %496 = vmatpush1.bf16.msra.mxu0 %v483
    %497 = vmatprep.subr.bf16.mxu0 0
    %498 = vmatpush1.bf16.msra.mxu0 %v482
    %499 = vmatprep.subr.bf16.mxu0 0
    %500 = vmatpush1.bf16.msra.mxu0 %v481
    %501 = vmatprep.subr.bf16.mxu0 0
    %502 = vmatpush1.bf16.msra.mxu0 %v480
    %503 = vmatprep.subr.bf16.mxu0 0
    %504 = vmatpush1.bf16.msra.mxu0 %v479
    %505 = vmatprep.subr.bf16.mxu0 0
    %506 = vmatpush1.bf16.msra.mxu0 %v478
    %507 = vmatprep.subr.bf16.mxu0 0
    %508 = vmatpush1.bf16.msra.mxu0 %v477
    %509 = vmatprep.subr.bf16.mxu0 0
    %510 = vmatpush2.bf16.msra.mxu0 0
    %511 = vmatprep.subr.bf16.mxu0 0
    %512 = vmatpush2.bf16.msra.mxu0 0
    %513 = vmatprep.subr.bf16.mxu0 0
    %514 = vmatpush2.bf16.msra.mxu0 0
    %515 = vmatprep.subr.bf16.mxu0 0
    %516 = vmatpush2.bf16.msra.mxu0 0
    %517 = vmatprep.subr.bf16.mxu0 0
    %518 = vmatpush2.bf16.msra.mxu0 0
    %519 = vmatprep.subr.bf16.mxu0 0
    %520 = vmatpush2.bf16.msra.mxu0 0
    %521 = vmatprep.subr.bf16.mxu0 0
    %522 = vmatpush2.bf16.msra.mxu0 0
    %523 = vmatprep.subr.bf16.mxu0 0
    %524 = vmatpush2.bf16.msra.mxu0 0
    %525 = vmatprep.mubr.bf16.mxu0 0
    %526 = vmatmul.mubr.bf16.gmra.mxu0 %v423
    %v527 = vpop.f32.mrf.mxu0
    %v528 = vadd.f32 %v444, %v527
    %v529 = vpop.f32.mrf.mxu0
    %v530 = vpop.f32.mrf.mxu0
    %v531 = vadd.f32 %v444, %v530
    %v532 = vpop.f32.mrf.mxu0
    %533 = vdwg.mxu0
    %534 = vst [vmem:[#allocation13] sm:$0xff] %v528
    %535 = vst [vmem:[#allocation13 + $0x8] sm:$0xff] %v531
    // Predicated region
    $region54: #{tpu_custom_call.1} parent=1 // pred_check
      _
    $region55: #{tpu_custom_call.1} parent=1 // pred_check_branch
      %537 = sbr.rel (0) target = $region57
    $region56: #{tpu_custom_call.1} parent=1 // pred_region
      %s539 = ssub.s32 256, 256
      %540 = vsyncadd [#allocation4], %s539
      %s541 = sshll.u32 [#allocation13], 4
      %s542 = int_to_ptr.vmem [resolvable:$true] %s541
      %547 = dma.vmem_to_hbm [thread:$0]  %s542, 256, %s7, [#allocation4], 128, 128, 8
    $region57: #{tpu_custom_call.1} parent=1 // pred_fallthru
      _
    // Predicated region
    $region58: #{tpu_custom_call.1} parent=1 // pred_check
      _
    $region59: #{tpu_custom_call.1} parent=1 // pred_check_branch
      %549 = sbr.rel (0) target = $region61
    $region60: #{tpu_custom_call.1} parent=1 // pred_region
      %550 = dma.done [#allocation4], 256
    $region61: #{tpu_custom_call.1} parent=1 // pred_fallthru
      _
    %551 = vsyncpa [#allocation3], 1
    %552 = vsyncpa [#allocation6], 1
    %553 = vsyncpa [#allocation9], 1
    %554 = vsyncpa [#allocation12], 1
    %555 = vsyncpa [#allocation4], 1

</llo_original>
